<compile_context>
chip_gen: v5e
topology: v5e:2x2
jax: 0.10.0
libtpu: 0.0.40
codegen_flags: <defaults>
</compile_context>

<pallas_src>
import functools

import jax
import jax.numpy as jnp
from jax.experimental import pallas as pl
from jax.experimental.pallas import tpu as pltpu


def _round_up(n, m):
    return ((n + m - 1) // m) * m


def _cdiv(a, b):
    return -(-a // b)


# ----------------------------------------------------------------------------
# Pallas kernel: full AAU_spatial forward on one (C, tile_hw) pixel block.
# Pixels live on the lane axis; channels on the sublane axis.
# `last_valid` is a compile-time constant; it is only set when HW does not
# divide evenly into tile_hw (ragged last block).
# ----------------------------------------------------------------------------
def aau_spatial_kernel(
    x_ref, att_ref,                       # [C, T] pixel blocks
    w1_ref, b1_ref,                       # conv1 + bn1 folded:  [r, C], [r, 1]
    w2_ref, b2_ref,                       # conv2 + bn2 folded:  [r, C], [r, 1]
    w3_ref, b3_ref,                       # conv3:               [r, 1], [1, 1]
    wres_ref, bres_ref,                   # resample (1 -> r):   [r, 1], [r, 1]
    w4_ref, b4_ref,                       # conv4:               [C, r], [C, 1]
    out_ref,                              # [C, T]
    *, last_valid=None,
):
    x = x_ref[...]                        # native dtype (f32 or bf16)
    a = att_ref[...]

    if last_valid is not None:
        # Ragged last HW block: zero the out-of-bounds lanes so garbage data
        # cannot produce inf/NaN (results in those lanes are discarded by the
        # masked writeback anyway).  Only compiled when HW % tile_hw != 0.
        T = x_ref.shape[-1]
        is_last = pl.program_id(1) == pl.num_programs(1) - 1
        col = jax.lax.broadcasted_iota(jnp.int32, (1, T), 1)
        lane_ok = col < jnp.where(is_last, last_valid, T)
        zero = jnp.zeros((), x.dtype)
        x = jnp.where(lane_ok, x, zero)
        a = jnp.where(lane_ok, a, zero)

    # x1 = leaky_relu(bn1(conv1(x)))            -> [r, T]   (MXU, f32 accum)
    x1 = jnp.dot(w1_ref[...], x, preferred_element_type=jnp.float32) + b1_ref[...]
    x1 = jnp.maximum(x1, 0.01 * x1)

    # a1 = leaky_relu(bn2(conv2(att)))          -> [r, T]
    a1 = jnp.dot(w2_ref[...], a, preferred_element_type=jnp.float32) + b2_ref[...]
    a1 = jnp.maximum(a1, 0.01 * a1)

    # spatial = relu(x1 + a1); beta = sigmoid(conv3(spatial))
    # conv3 is a degenerate (K=r, N=1) matmul -> keep it on the VPU/XLU.
    s_sum = x1 + a1                                                        # [r, T]
    sp = jnp.maximum(s_sum, 0.0)
    s = jnp.sum(sp * w3_ref[...], axis=0, keepdims=True) + b3_ref[...]     # [1, T]
    beta = jax.nn.sigmoid(s)                                               # [1, T]

    # resample is Conv2d(1, r, 1):
    #   y = x1*(wres*(1-beta)+bres) + a1*(wres*beta+bres)
    #     = wres*(x1 + beta*(a1-x1)) + bres*(x1+a1)            (reuses s_sum)
    y = wres_ref[...] * (x1 + beta * (a1 - x1)) + bres_ref[...] * s_sum    # [r, T]

    # result = conv4(y)                          -> [C, T]
    out = jnp.dot(w4_ref[...], y, preferred_element_type=jnp.float32) + b4_ref[...]
    out_ref[...] = out.astype(out_ref.dtype)


# ----------------------------------------------------------------------------
# Wrapper: pure-reshape NCHW glue + pallas_call (no transposes, no pads).
# ----------------------------------------------------------------------------
def aau_spatial_forward(x_nchw, att_nchw, params, *, max_tile_hw=8192):
    B, C, H, W = x_nchw.shape
    HW = H * W
    r = params["w1"].shape[0]
    itemsize = jnp.dtype(x_nchw.dtype).itemsize

    # --- per-generation VMEM budget (caps itself on v7x's 64 MiB/TC) ---
    try:
        vmem_cap = int(pltpu.get_tpu_info().vmem_capacity_bytes)
    except Exception:
        vmem_cap = 64 * 1024 * 1024          # conservative fallback (v7x per-TC)
    vmem_budget = min((vmem_cap * 3) // 4, 100 * 1024 * 1024)

    # --- tile sizing from the budget ---
    # Streamed pipeline buffers: x, att, out, each double-buffered [C, tile_hw],
    # plus rough f32 intermediates (out + x1/a1/y at [r, tile_hw]).
    bytes_per_col = 3 * 2 * C * itemsize + 4 * (C + 3 * r)
    tile_hw = (vmem_budget // bytes_per_col) // 128 * 128
    tile_hw = max(128, min(tile_hw, max_tile_hw, _round_up(HW, 128)))

    # --- guarantee >= 2 grid steps so both v7x TensorCores get work ---
    n_hw = _cdiv(HW, tile_hw)
    if B * n_hw < 2 and HW > 128:
        tile_hw = max(128, _round_up(_cdiv(HW, 2), 128))
        n_hw = _cdiv(HW, tile_hw)

    # Ragged last block? (compile-time decision; no jnp.pad, no extra HBM pass)
    last_valid = HW - (n_hw - 1) * tile_hw
    kernel = functools.partial(
        aau_spatial_kernel,
        last_valid=(last_valid if last_valid != tile_hw else None),
    )

    x_flat = x_nchw.reshape(B, C, HW)
    att_flat = att_nchw.reshape(B, C, HW)

    grid = (B, n_hw)

    def pix_spec():
        # Leading batch dim squeezed out of the kernel Ref.
        return pl.BlockSpec((None, C, tile_hw), lambda b, j: (b, 0, j))

    def full_spec(shape):
        # Tiny weights: DMA'd once, stay resident (constant index map).
        return pl.BlockSpec(shape, lambda b, j: (0, 0))

    out_flat = pl.pallas_call(
        kernel,
        out_shape=jax.ShapeDtypeStruct((B, C, HW), x_nchw.dtype),
        grid_spec=pltpu.PrefetchScalarGridSpec(
            num_scalar_prefetch=0,
            grid=grid,
            in_specs=[
                pix_spec(),                      # x
                pix_spec(),                      # att
                full_spec((r, C)),               # w1 (folded bn1)
                full_spec((r, 1)),               # b1
                full_spec((r, C)),               # w2 (folded bn2)
                full_spec((r, 1)),               # b2
                full_spec((r, 1)),               # w3
                full_spec((1, 1)),               # b3
                full_spec((r, 1)),               # w_res
                full_spec((r, 1)),               # b_res
                full_spec((C, r)),               # w4
                full_spec((C, 1)),               # b4
            ],
            out_specs=pix_spec(),
        ),
        compiler_params=pltpu.CompilerParams(
            dimension_semantics=("parallel", "parallel"),
            vmem_limit_bytes=int(vmem_budget),
        ),
    )(
        x_flat, att_flat,
        params["w1"], params["b1"],
        params["w2"], params["b2"],
        params["w3"], params["b3"],
        params["w_res"], params["b_res"],
        params["w4"], params["b4"],
    )

    return out_flat.reshape(B, C, H, W)


# ----------------------------------------------------------------------------
# Deterministic parameter construction (conv weights + eval-mode BN folding).
# Weights are stored in the kernel's "weights-on-the-left" orientation:
#   w1, w2: [r, C]   w3, w_res, b_res: [r, 1]   w4: [C, r]   b4: [C, 1]
# ----------------------------------------------------------------------------
def make_params(key, dim, ratio=16, dtype=jnp.float32):
    r = dim // ratio
    ks = jax.random.split(key, 12)

    def rnd(k, shape, scale=0.1):
        return (scale * jax.random.normal(k, shape)).astype(dtype)

    w1 = rnd(ks[0], (r, dim)); b1 = rnd(ks[1], (r,))
    w2 = rnd(ks[2], (r, dim)); b2 = rnd(ks[3], (r,))
    w3 = rnd(ks[4], (r, 1));   b3 = rnd(ks[5], (1,))      # conv3 stored transposed
    w_res = rnd(ks[6], (r, 1)); b_res = rnd(ks[7], (r,))
    w4 = rnd(ks[8], (dim, r)); b4 = rnd(ks[9], (dim,))

    # BatchNorm params (eval mode): gamma, beta, running_mean, running_var
    def bn(k, n):
        k1, k2, k3, k4 = jax.random.split(k, 4)
        gamma = 1.0 + 0.1 * jax.random.normal(k1, (n,))
        beta = 0.1 * jax.random.normal(k2, (n,))
        mean = 0.1 * jax.random.normal(k3, (n,))
        var = jnp.abs(1.0 + 0.1 * jax.random.normal(k4, (n,)))
        return gamma.astype(dtype), beta.astype(dtype), mean.astype(dtype), var.astype(dtype)

    g1, be1, m1, v1 = bn(ks[10], r)
    g2, be2, m2, v2 = bn(ks[11], r)
    eps = 1e-5

    # fold BN into conv: y = (w @ x + b - mean) * gamma/sqrt(var+eps) + beta_bn
    s1 = g1 / jnp.sqrt(v1 + eps)
    w1f = w1 * s1[:, None]
    b1f = (b1 - m1) * s1 + be1

    s2 = g2 / jnp.sqrt(v2 + eps)
    w2f = w2 * s2[:, None]
    b2f = (b2 - m2) * s2 + be2

    return {
        "w1": w1f, "b1": b1f.reshape(r, 1),
        "w2": w2f, "b2": b2f.reshape(r, 1),
        "w3": w3, "b3": b3.reshape(1, 1),
        "w_res": w_res, "b_res": b_res.reshape(r, 1),
        "w4": w4, "b4": b4.reshape(dim, 1),
    }


# ----------------------------------------------------------------------------
# Pure-JAX reference (same folded-BN semantics) for verification.
# ----------------------------------------------------------------------------
def reference_forward(x_nchw, att_nchw, p):
    B, C, H, W = x_nchw.shape
    x = jnp.transpose(x_nchw, (0, 2, 3, 1)).reshape(-1, C).astype(jnp.float32)
    a = jnp.transpose(att_nchw, (0, 2, 3, 1)).reshape(-1, C).astype(jnp.float32)

    def lrelu(v):
        return jnp.where(v >= 0, v, 0.01 * v)

    x1 = lrelu(x @ p["w1"].T + p["b1"].T)                 # [N, r]
    a1 = lrelu(a @ p["w2"].T + p["b2"].T)                 # [N, r]
    sp = jnp.maximum(x1 + a1, 0.0)
    beta = jax.nn.sigmoid(sp @ p["w3"] + p["b3"])         # [N, 1]
    beta_1 = 1.0 - beta
    x2 = x1 * (beta_1 @ p["w_res"].T + p["b_res"].T)      # [N, r]
    a2 = a1 * (beta @ p["w_res"].T + p["b_res"].T)        # [N, r]
    out = (x2 + a2) @ p["w4"].T + p["b4"].T               # [N, C]
    return jnp.transpose(out.reshape(B, H, W, C), (0, 3, 1, 2))


if __name__ == "__main__":
    key = jax.random.PRNGKey(0)
    k_x, k_a, k_p, k_x2, k_a2 = jax.random.split(key, 5)

    # ---- Test 1: f32, HW a multiple of 128 (clean, unmasked stores) --------
    B, dim, H, W = 2, 64, 16, 16      # dim // ratio = 4 with default ratio=16
    ratio = 16

    x = jax.random.normal(k_x, (B, dim, H, W), dtype=jnp.float32)
    att = jax.random.normal(k_a, (B, dim, H, W), dtype=jnp.float32)
    params = make_params(k_p, dim, ratio)

    out = jax.block_until_ready(aau_spatial_forward(x, att, params))
    ref = jax.block_until_ready(reference_forward(x, att, params))
    assert out.shape == (B, dim, H, W)
    assert jnp.allclose(out, ref, atol=1e-4, rtol=1e-4), "f32 mismatch vs reference"

    # ---- Test 2: bf16 streamed I/O (the big bandwidth lever) ---------------
    x_bf = x.astype(jnp.bfloat16)
    att_bf = att.astype(jnp.bfloat16)
    params_bf = jax.tree_util.tree_map(lambda w: w.astype(jnp.bfloat16), params)
    out_bf = jax.block_until_ready(aau_spatial_forward(x_bf, att_bf, params_bf))
    assert out_bf.dtype == jnp.bfloat16
    err = float(jnp.max(jnp.abs(out_bf.astype(jnp.float32) - ref)))
    assert err < 0.1, f"bf16 mismatch vs reference (max abs err {err})"

    # ---- Test 3: ragged HW (not a multiple of 128; masked last block) ------
    H2 = W2 = 10                      # HW = 100 -> ragged tile of 128
    x2 = jax.random.normal(k_x2, (B, dim, H2, W2), dtype=jnp.float32)
    att2 = jax.random.normal(k_a2, (B, dim, H2, W2), dtype=jnp.float32)
    out2 = jax.block_until_ready(aau_spatial_forward(x2, att2, params))
    ref2 = jax.block_until_ready(reference_forward(x2, att2, params))
    assert out2.shape == (B, dim, H2, W2)
    assert jnp.allclose(out2, ref2, atol=1e-4, rtol=1e-4), "ragged mismatch vs reference"

    print("KERNEL_OK")
</pallas_src>

<mosaic_0001>
module attributes {stable_mosaic.version = 11 : i64} {
  func.func @aau_spatial_kernel(%arg0: i32, %arg1: i32, %arg2: memref<1x64x256xf32, #tpu.memory_space<vmem>>, %arg3: memref<1x64x256xf32, #tpu.memory_space<vmem>>, %arg4: memref<4x64xf32, #tpu.memory_space<vmem>>, %arg5: memref<4x1xf32, #tpu.memory_space<vmem>>, %arg6: memref<4x64xf32, #tpu.memory_space<vmem>>, %arg7: memref<4x1xf32, #tpu.memory_space<vmem>>, %arg8: memref<4x1xf32, #tpu.memory_space<vmem>>, %arg9: memref<1x1xf32, #tpu.memory_space<vmem>>, %arg10: memref<4x1xf32, #tpu.memory_space<vmem>>, %arg11: memref<4x1xf32, #tpu.memory_space<vmem>>, %arg12: memref<64x4xf32, #tpu.memory_space<vmem>>, %arg13: memref<64x1xf32, #tpu.memory_space<vmem>>, %arg14: memref<1x64x256xf32, #tpu.memory_space<vmem>>) attributes {dimension_semantics = [#tpu.dimension_semantics<parallel>, #tpu.dimension_semantics<parallel>], iteration_bounds = array<i64: 2, 1>, scalar_prefetch = 0 : i64, scratch_operands = 0 : i64, tpu.core_type = #tpu.core_type<tc>, window_params = [{transform_indices = @transform_0, window_bounds = array<i64: 1, 64, 256>}, {transform_indices = @transform_1, window_bounds = array<i64: 1, 64, 256>}, {pipeline_mode = #tpu.pipeline_mode<synchronous>, transform_indices = @transform_2, window_bounds = array<i64: 4, 64>}, {pipeline_mode = #tpu.pipeline_mode<synchronous>, transform_indices = @transform_3, window_bounds = array<i64: 4, 1>}, {pipeline_mode = #tpu.pipeline_mode<synchronous>, transform_indices = @transform_4, window_bounds = array<i64: 4, 64>}, {pipeline_mode = #tpu.pipeline_mode<synchronous>, transform_indices = @transform_5, window_bounds = array<i64: 4, 1>}, {pipeline_mode = #tpu.pipeline_mode<synchronous>, transform_indices = @transform_6, window_bounds = array<i64: 4, 1>}, {pipeline_mode = #tpu.pipeline_mode<synchronous>, transform_indices = @transform_7, window_bounds = array<i64: 1, 1>}, {pipeline_mode = #tpu.pipeline_mode<synchronous>, transform_indices = @transform_8, window_bounds = array<i64: 4, 1>}, {pipeline_mode = #tpu.pipeline_mode<synchronous>, transform_indices = @transform_9, window_bounds = array<i64: 4, 1>}, {pipeline_mode = #tpu.pipeline_mode<synchronous>, transform_indices = @transform_10, window_bounds = array<i64: 64, 4>}, {pipeline_mode = #tpu.pipeline_mode<synchronous>, transform_indices = @transform_11, window_bounds = array<i64: 64, 1>}, {transform_indices = @transform_12, window_bounds = array<i64: 1, 64, 256>}]} {
    %c0 = arith.constant 0 : index
    %c0_0 = arith.constant 0 : index
    %c0_1 = arith.constant 0 : index
    %0 = vector.load %arg2[%c0, %c0_0, %c0_1] : memref<1x64x256xf32, #tpu.memory_space<vmem>>, vector<1x64x256xf32>
    %1 = vector.shape_cast %0 : vector<1x64x256xf32> to vector<64x256xf32>
    %c0_2 = arith.constant 0 : index
    %c0_3 = arith.constant 0 : index
    %c0_4 = arith.constant 0 : index
    %2 = vector.load %arg3[%c0_2, %c0_3, %c0_4] : memref<1x64x256xf32, #tpu.memory_space<vmem>>, vector<1x64x256xf32>
    %3 = vector.shape_cast %2 : vector<1x64x256xf32> to vector<64x256xf32>
    %c0_5 = arith.constant 0 : index
    %c0_6 = arith.constant 0 : index
    %4 = vector.load %arg4[%c0_5, %c0_6] : memref<4x64xf32, #tpu.memory_space<vmem>>, vector<4x64xf32>
    %cst = arith.constant dense<0.000000e+00> : vector<4x256xf32>
    %5 = tpu.matmul %4, %1, %cst {dimension_numbers = #tpu.dot_dimension_numbers<[1], [0], [0], [1], [0, 0, 1, 1], [], []>} : vector<4x64xf32>, vector<64x256xf32>, vector<4x256xf32> -> vector<4x256xf32>
    %c0_7 = arith.constant 0 : index
    %c0_8 = arith.constant 0 : index
    %6 = vector.load %arg5[%c0_7, %c0_8] : memref<4x1xf32, #tpu.memory_space<vmem>>, vector<4x1xf32>
    %7 = vector.broadcast %6 : vector<4x1xf32> to vector<4x256xf32>
    %8 = arith.addf %5, %7 : vector<4x256xf32>
    %cst_9 = arith.constant 0.00999999977 : f32
    %9 = vector.broadcast %cst_9 : f32 to vector<4x256xf32>
    %10 = arith.mulf %9, %8 : vector<4x256xf32>
    %11 = arith.maximumf %8, %10 : vector<4x256xf32>
    %c0_10 = arith.constant 0 : index
    %c0_11 = arith.constant 0 : index
    %12 = vector.load %arg6[%c0_10, %c0_11] : memref<4x64xf32, #tpu.memory_space<vmem>>, vector<4x64xf32>
    %cst_12 = arith.constant dense<0.000000e+00> : vector<4x256xf32>
    %13 = tpu.matmul %12, %3, %cst_12 {dimension_numbers = #tpu.dot_dimension_numbers<[1], [0], [0], [1], [0, 0, 1, 1], [], []>} : vector<4x64xf32>, vector<64x256xf32>, vector<4x256xf32> -> vector<4x256xf32>
    %c0_13 = arith.constant 0 : index
    %c0_14 = arith.constant 0 : index
    %14 = vector.load %arg7[%c0_13, %c0_14] : memref<4x1xf32, #tpu.memory_space<vmem>>, vector<4x1xf32>
    %15 = vector.broadcast %14 : vector<4x1xf32> to vector<4x256xf32>
    %16 = arith.addf %13, %15 : vector<4x256xf32>
    %cst_15 = arith.constant 0.00999999977 : f32
    %17 = vector.broadcast %cst_15 : f32 to vector<4x256xf32>
    %18 = arith.mulf %17, %16 : vector<4x256xf32>
    %19 = arith.maximumf %16, %18 : vector<4x256xf32>
    %20 = arith.addf %11, %19 : vector<4x256xf32>
    %cst_16 = arith.constant 0.000000e+00 : f32
    %21 = vector.broadcast %cst_16 : f32 to vector<4x256xf32>
    %22 = arith.maximumf %20, %21 : vector<4x256xf32>
    %c0_17 = arith.constant 0 : index
    %c0_18 = arith.constant 0 : index
    %23 = vector.load %arg8[%c0_17, %c0_18] : memref<4x1xf32, #tpu.memory_space<vmem>>, vector<4x1xf32>
    %24 = vector.broadcast %23 : vector<4x1xf32> to vector<4x256xf32>
    %25 = arith.mulf %22, %24 : vector<4x256xf32>
    %cst_19 = arith.constant dense<0.000000e+00> : vector<256xf32>
    %26 = vector.multi_reduction <add>, %25, %cst_19 [0] : vector<4x256xf32> to vector<256xf32>
    %27 = vector.shape_cast %26 : vector<256xf32> to vector<1x256xf32>
    %c0_20 = arith.constant 0 : index
    %c0_21 = arith.constant 0 : index
    %28 = vector.load %arg9[%c0_20, %c0_21] : memref<1x1xf32, #tpu.memory_space<vmem>>, vector<1x1xf32>
    %29 = vector.broadcast %28 : vector<1x1xf32> to vector<1x256xf32>
    %30 = arith.addf %27, %29 : vector<1x256xf32>
    %31 = arith.negf %30 : vector<1x256xf32>
    %32 = math.exp %31 : vector<1x256xf32>
    %cst_22 = arith.constant 1.000000e+00 : f32
    %33 = vector.broadcast %cst_22 : f32 to vector<1x256xf32>
    %34 = arith.addf %33, %32 : vector<1x256xf32>
    %35 = arith.divf %33, %34 : vector<1x256xf32>
    %c0_23 = arith.constant 0 : index
    %c0_24 = arith.constant 0 : index
    %36 = vector.load %arg10[%c0_23, %c0_24] : memref<4x1xf32, #tpu.memory_space<vmem>>, vector<4x1xf32>
    %37 = arith.subf %19, %11 : vector<4x256xf32>
    %38 = vector.broadcast %35 : vector<1x256xf32> to vector<4x256xf32>
    %39 = arith.mulf %38, %37 : vector<4x256xf32>
    %40 = arith.addf %11, %39 : vector<4x256xf32>
    %41 = vector.broadcast %36 : vector<4x1xf32> to vector<4x256xf32>
    %42 = arith.mulf %41, %40 : vector<4x256xf32>
    %c0_25 = arith.constant 0 : index
    %c0_26 = arith.constant 0 : index
    %43 = vector.load %arg11[%c0_25, %c0_26] : memref<4x1xf32, #tpu.memory_space<vmem>>, vector<4x1xf32>
    %44 = vector.broadcast %43 : vector<4x1xf32> to vector<4x256xf32>
    %45 = arith.mulf %44, %20 : vector<4x256xf32>
    %46 = arith.addf %42, %45 : vector<4x256xf32>
    %c0_27 = arith.constant 0 : index
    %c0_28 = arith.constant 0 : index
    %47 = vector.load %arg12[%c0_27, %c0_28] : memref<64x4xf32, #tpu.memory_space<vmem>>, vector<64x4xf32>
    %cst_29 = arith.constant dense<0.000000e+00> : vector<64x256xf32>
    %48 = tpu.matmul %47, %46, %cst_29 {dimension_numbers = #tpu.dot_dimension_numbers<[1], [0], [0], [1], [0, 0, 1, 1], [], []>} : vector<64x4xf32>, vector<4x256xf32>, vector<64x256xf32> -> vector<64x256xf32>
    %c0_30 = arith.constant 0 : index
    %c0_31 = arith.constant 0 : index
    %49 = vector.load %arg13[%c0_30, %c0_31] : memref<64x1xf32, #tpu.memory_space<vmem>>, vector<64x1xf32>
    %50 = vector.broadcast %49 : vector<64x1xf32> to vector<64x256xf32>
    %51 = arith.addf %48, %50 : vector<64x256xf32>
    %c0_32 = arith.constant 0 : index
    %c0_33 = arith.constant 0 : index
    %c0_34 = arith.constant 0 : index
    %52 = vector.load %arg14[%c0_32, %c0_33, %c0_34] : memref<1x64x256xf32, #tpu.memory_space<vmem>>, vector<1x64x256xf32>
    %53 = vector.shape_cast %52 : vector<1x64x256xf32> to vector<64x256xf32>
    %54 = vector.shape_cast %51 : vector<64x256xf32> to vector<1x64x256xf32>
    tpu.vector_store %arg14[%c0_32, %c0_33, %c0_34], %54 {strides = array<i32>} : memref<1x64x256xf32, #tpu.memory_space<vmem>>, vector<1x64x256xf32>,
    return
  }
  func.func @transform_0(%arg0: i32, %arg1: i32) -> (i32, i32, i32) {
    %c0_i32 = arith.constant 0 : i32
    %c0_i32_0 = arith.constant 0 : i32
    return %arg0, %c0_i32, %arg1 : i32, i32, i32
  }
  func.func @transform_1(%arg0: i32, %arg1: i32) -> (i32, i32, i32) {
    %c0_i32 = arith.constant 0 : i32
    %c0_i32_0 = arith.constant 0 : i32
    return %arg0, %c0_i32, %arg1 : i32, i32, i32
  }
  func.func @transform_2(%arg0: i32, %arg1: i32) -> (i32, i32) {
    %c0_i32 = arith.constant 0 : i32
    %c0_i32_0 = arith.constant 0 : i32
    %c0_i32_1 = arith.constant 0 : i32
    return %c0_i32, %c0_i32_0 : i32, i32
  }
  func.func @transform_3(%arg0: i32, %arg1: i32) -> (i32, i32) {
    %c0_i32 = arith.constant 0 : i32
    %c0_i32_0 = arith.constant 0 : i32
    %c0_i32_1 = arith.constant 0 : i32
    return %c0_i32, %c0_i32_0 : i32, i32
  }
  func.func @transform_4(%arg0: i32, %arg1: i32) -> (i32, i32) {
    %c0_i32 = arith.constant 0 : i32
    %c0_i32_0 = arith.constant 0 : i32
    %c0_i32_1 = arith.constant 0 : i32
    return %c0_i32, %c0_i32_0 : i32, i32
  }
  func.func @transform_5(%arg0: i32, %arg1: i32) -> (i32, i32) {
    %c0_i32 = arith.constant 0 : i32
    %c0_i32_0 = arith.constant 0 : i32
    %c0_i32_1 = arith.constant 0 : i32
    return %c0_i32, %c0_i32_0 : i32, i32
  }
  func.func @transform_6(%arg0: i32, %arg1: i32) -> (i32, i32) {
    %c0_i32 = arith.constant 0 : i32
    %c0_i32_0 = arith.constant 0 : i32
    %c0_i32_1 = arith.constant 0 : i32
    return %c0_i32, %c0_i32_0 : i32, i32
  }
  func.func @transform_7(%arg0: i32, %arg1: i32) -> (i32, i32) {
    %c0_i32 = arith.constant 0 : i32
    %c0_i32_0 = arith.constant 0 : i32
    %c0_i32_1 = arith.constant 0 : i32
    return %c0_i32, %c0_i32_0 : i32, i32
  }
  func.func @transform_8(%arg0: i32, %arg1: i32) -> (i32, i32) {
    %c0_i32 = arith.constant 0 : i32
    %c0_i32_0 = arith.constant 0 : i32
    %c0_i32_1 = arith.constant 0 : i32
    return %c0_i32, %c0_i32_0 : i32, i32
  }
  func.func @transform_9(%arg0: i32, %arg1: i32) -> (i32, i32) {
    %c0_i32 = arith.constant 0 : i32
    %c0_i32_0 = arith.constant 0 : i32
    %c0_i32_1 = arith.constant 0 : i32
    return %c0_i32, %c0_i32_0 : i32, i32
  }
  func.func @transform_10(%arg0: i32, %arg1: i32) -> (i32, i32) {
    %c0_i32 = arith.constant 0 : i32
    %c0_i32_0 = arith.constant 0 : i32
    %c0_i32_1 = arith.constant 0 : i32
    return %c0_i32, %c0_i32_0 : i32, i32
  }
  func.func @transform_11(%arg0: i32, %arg1: i32) -> (i32, i32) {
    %c0_i32 = arith.constant 0 : i32
    %c0_i32_0 = arith.constant 0 : i32
    %c0_i32_1 = arith.constant 0 : i32
    return %c0_i32, %c0_i32_0 : i32, i32
  }
  func.func @transform_12(%arg0: i32, %arg1: i32) -> (i32, i32, i32) {
    %c0_i32 = arith.constant 0 : i32
    %c0_i32_0 = arith.constant 0 : i32
    return %arg0, %c0_i32, %arg1 : i32, i32, i32
  }
}

</mosaic_0001>

<llo_original>
// kernel: tpu_custom_call.1
$region0: #{tpu_custom_call.1}
  #allocation0 [shape = 'u32[]', space=smem, size = 0x4, offset = 0x4, fixed_abs, tag = 'smem constant byte address 0x4 - core index']
  #allocation1 [shape = 'u32[72,128]{1,0:T(1,128)}', space=vmem, size = 0x9000, scoped, tag = 'internal scratch']
  #allocation2 [shape = 'f32[1,1]{1,0:T(1,128)S(1)}', space=vmem, size = 0x200, scoped, tag = 'scoped memory for tpu_custom_call.1']
  %s0 = inlined_call_operand.hbm [shape: f32[2,64,256], index: 0, kind: input, shape index: {}]
  %s1 = inlined_call_operand.hbm [shape: f32[2,64,256], index: 1, kind: input, shape index: {}]
  %s2 = inlined_call_operand.vmem [shape: f32[4,64], index: 2, kind: input, shape index: {}]
  %s3 = inlined_call_operand.vmem [shape: f32[4,1], index: 3, kind: input, shape index: {}]
  %s4 = inlined_call_operand.vmem [shape: f32[4,64], index: 4, kind: input, shape index: {}]
  %s5 = inlined_call_operand.vmem [shape: f32[4,1], index: 5, kind: input, shape index: {}]
  %s6 = inlined_call_operand.vmem [shape: f32[4,1], index: 6, kind: input, shape index: {}]
  %s7 = inlined_call_operand.<no memory space> [shape: f32[1,1], index: 7, kind: input, shape index: {}]
  %s8 = inlined_call_operand.vmem [shape: f32[4,1], index: 8, kind: input, shape index: {}]
  %s9 = inlined_call_operand.vmem [shape: f32[4,1], index: 9, kind: input, shape index: {}]
  %s10 = inlined_call_operand.vmem [shape: f32[64,4], index: 10, kind: input, shape index: {}]
  %s11 = inlined_call_operand.vmem [shape: f32[64,1], index: 11, kind: input, shape index: {}]
  %s12 = inlined_call_operand.hbm [shape: f32[2,64,256], index: 12, kind: output, shape index: {}]
  %s13 = sld [smem:[#allocation0]]
  $region89: #{tpu_custom_call.1} parent=0
    _
  %s15 = ssub.s32 1, %s13
  %s16 = scalar_select 0, %s15, %s13
  %v17 = vstv %s7
  %18 = vst [vmem:[#allocation2] sm:$0x1] %v17
  $region1: #{tpu_custom_call.1} parent=0
    #allocation3 [shape = 'u8[131072]{0}', space=vmem, size = 0x20000, scoped, tag = 'input window, operand 0']
    #allocation4 [shape = 's32[2]{0}', space=sflag, size = 0x8, scoped, tag = 'scoped memory for tpu_custom_call.1']
    #allocation5 [shape = 's32[2]{0}', space=sflag, size = 0x8, scoped, tag = 'scoped memory for tpu_custom_call.1']
    #allocation6 [shape = 'u8[131072]{0}', space=vmem, size = 0x20000, scoped, tag = 'input window, operand 1']
    #allocation7 [shape = 's32[2]{0}', space=sflag, size = 0x8, scoped, tag = 'scoped memory for tpu_custom_call.1']
    #allocation8 [shape = 'u8[131072]{0}', space=vmem, size = 0x20000, scoped, tag = 'output window, operand 0']
    %19 = vsyncpa [#allocation4], 0
    %s20 = scalar_lea.sflag [#allocation4], 1
    %21 = vsyncpa %s20, 0
    %22 = vsyncpa [#allocation7], 0
    %s23 = scalar_lea.sflag [#allocation7], 1
    %24 = vsyncpa %s23, 0
    %25 = vsyncpa [#allocation5], 0
    %s26 = scalar_lea.sflag [#allocation5], 1
    %27 = vsyncpa %s26, 0
    loop: start=0, step=1, limit=4
    $region2: #{tpu_custom_call.1} parent=1 // loop_pre_header
      _
    $region3: #{tpu_custom_call.1} parent=1 // loop_header
      %s29 = sphi 0, %s33
      %p30 = scmp.ge.s32.totalorder %s29, 4
      %s36 = sphi 0, %s48
      %s37 = sphi 0, %s44
      %s38 = sphi 0, %s36
      %s39 = sphi 0, %s37
      %s40 = sphi 0, %s38
      %s41 = sphi 0, %s39
      %s53 = sphi 0, %s55
      %s56 = sphi 0, %s53
      %s57 = sphi 0, %s56
      %s73 = sphi 0, %s57
      %s81 = sphi 0, %s83
      %s84 = sphi 0, %s81
      %s85 = sphi 0, %s84
      %s101 = sphi 0, %s85
      %s105 = sphi 0, %s105
      %s107 = sphi 0, %s105
      %s108 = sphi 0, %s107
      %s122 = sphi 0, %s108
      %s126 = sphi 0, %s126
      %s128 = sphi 0, %s126
      %s129 = sphi 0, %s128
      %s143 = sphi 0, %s129
      %s147 = sphi 0, %s147
      %s149 = sphi 0, %s147
      %s150 = sphi 0, %s149
      %s164 = sphi 0, %s150
      %s168 = sphi 0, %s168
      %s170 = sphi 0, %s168
      %s171 = sphi 0, %s170
      %s185 = sphi 0, %s171
      %s189 = sphi 0, %s189
      %s191 = sphi 0, %s189
      %s192 = sphi 0, %s191
      %s206 = sphi 0, %s192
      %s210 = sphi 0, %s210
      %s212 = sphi 0, %s210
      %s213 = sphi 0, %s212
      %s227 = sphi 0, %s213
      %s231 = sphi 0, %s231
      %s233 = sphi 0, %s231
      %s234 = sphi 0, %s233
      %s248 = sphi 0, %s234
      %s252 = sphi 0, %s252
      %s254 = sphi 0, %s252
      %s255 = sphi 0, %s254
      %s269 = sphi 0, %s255
      %s273 = sphi 0, %s273
      %s275 = sphi 0, %s273
      %s276 = sphi 0, %s275
      %s290 = sphi 0, %s276
      %s294 = sphi 0, %s294
      %s296 = sphi 0, %s294
      %s297 = sphi 0, %s296
      %s311 = sphi 0, %s297
      %s319 = sphi 0, %s321
      %s322 = sphi 0, %s319
      %s323 = sphi 0, %s322
      %s339 = sphi 0, %s323
    $region4: #{tpu_custom_call.1} parent=1 // loop_header_branch
      %32 = sbr.rel (%p30) target = $region8
    $region5: #{tpu_custom_call.1} parent=1 // loop_body
      %s34 = ssub.s32 %s29, 1
      %s35 = ssub.s32 %s29, 2
      %s42 = sadd.s32 1, %s37
      %p43 = scmp.ge.s32.totalorder %s42, 1
      %s44 = scalar_select %p43, 0, %s42
      %s45 = sadd.s32 1, %s36
      %s46 = scalar_select %p43, %s45, %s36
      %p47 = scmp.ge.s32.totalorder %s46, 2
      %s48 = scalar_select %p47, 0, %s46
      %s49 = ssub.s32 %s36, %s48
      %s50 = ssub.s32 %s37, %s44
      %s51 = sor.u32 %s49, %s50
      %p52 = scmp.eq.s32.totalorder %s51, 0
      %s54 = sadd.s32 %s53, 1
      %s55 = scalar_select %p52, %s53, %s54
      %p58 = pneg %p52
      %p59 = scmp.eq.s32.totalorder %s29, 1
      %p60 = por %p58, %p59
      %p61 = scmp.ne.s32.totalorder %s53, %s56
      %p62 = scmp.eq.s32.totalorder %s29, 0
      %p63 = por %p61, %p62
      %p64 = scmp.ne.s32.totalorder %s53, %s56
      %p65 = scmp.eq.s32.totalorder %s34, 1
      %p66 = por %p64, %p65
      %p67 = scmp.ne.s32.totalorder %s56, %s57
      %p68 = scmp.eq.s32.totalorder %s34, 0
      %p69 = por %p67, %p68
      %p70 = scmp.ne.s32.totalorder %s56, %s57
      %p71 = scmp.eq.s32.totalorder %s35, 1
      %p72 = por %p70, %p71
      %p74 = scmp.ne.s32.totalorder %s57, %s73
      %p75 = scmp.eq.s32.totalorder %s35, 0
      %p76 = por %p74, %p75
      %s77 = ssub.s32 %s36, %s48
      %s78 = ssub.s32 %s37, %s44
      %s79 = sor.u32 %s77, %s78
      %p80 = scmp.eq.s32.totalorder %s79, 0
      %s82 = sadd.s32 %s81, 1
      %s83 = scalar_select %p80, %s81, %s82
      %p86 = pneg %p80
      %p87 = scmp.eq.s32.totalorder %s29, 1
      %p88 = por %p86, %p87
      %p89 = scmp.ne.s32.totalorder %s81, %s84
      %p90 = scmp.eq.s32.totalorder %s29, 0
      %p91 = por %p89, %p90
      %p92 = scmp.ne.s32.totalorder %s81, %s84
      %p93 = scmp.eq.s32.totalorder %s34, 1
      %p94 = por %p92, %p93
      %p95 = scmp.ne.s32.totalorder %s84, %s85
      %p96 = scmp.eq.s32.totalorder %s34, 0
      %p97 = por %p95, %p96
      %p98 = scmp.ne.s32.totalorder %s84, %s85
      %p99 = scmp.eq.s32.totalorder %s35, 1
      %p100 = por %p98, %p99
      %p102 = scmp.ne.s32.totalorder %s85, %s101
      %p103 = scmp.eq.s32.totalorder %s35, 0
      %p104 = por %p102, %p103
      %s106 = sadd.s32 %s105, 1
      %p109 = scmp.eq.s32.totalorder %s29, 1
      %p110 = scmp.ne.s32.totalorder %s105, %s107
      %p111 = scmp.eq.s32.totalorder %s29, 0
      %p112 = por %p110, %p111
      %p113 = scmp.ne.s32.totalorder %s105, %s107
      %p114 = scmp.eq.s32.totalorder %s34, 1
      %p115 = por %p113, %p114
      %p116 = scmp.ne.s32.totalorder %s107, %s108
      %p117 = scmp.eq.s32.totalorder %s34, 0
      %p118 = por %p116, %p117
      %p119 = scmp.ne.s32.totalorder %s107, %s108
      %p120 = scmp.eq.s32.totalorder %s35, 1
      %p121 = por %p119, %p120
      %p123 = scmp.ne.s32.totalorder %s108, %s122
      %p124 = scmp.eq.s32.totalorder %s35, 0
      %p125 = por %p123, %p124
      %s127 = sadd.s32 %s126, 1
      %p130 = scmp.eq.s32.totalorder %s29, 1
      %p131 = scmp.ne.s32.totalorder %s126, %s128
      %p132 = scmp.eq.s32.totalorder %s29, 0
      %p133 = por %p131, %p132
      %p134 = scmp.ne.s32.totalorder %s126, %s128
      %p135 = scmp.eq.s32.totalorder %s34, 1
      %p136 = por %p134, %p135
      %p137 = scmp.ne.s32.totalorder %s128, %s129
      %p138 = scmp.eq.s32.totalorder %s34, 0
      %p139 = por %p137, %p138
      %p140 = scmp.ne.s32.totalorder %s128, %s129
      %p141 = scmp.eq.s32.totalorder %s35, 1
      %p142 = por %p140, %p141
      %p144 = scmp.ne.s32.totalorder %s129, %s143
      %p145 = scmp.eq.s32.totalorder %s35, 0
      %p146 = por %p144, %p145
      %s148 = sadd.s32 %s147, 1
      %p151 = scmp.eq.s32.totalorder %s29, 1
      %p152 = scmp.ne.s32.totalorder %s147, %s149
      %p153 = scmp.eq.s32.totalorder %s29, 0
      %p154 = por %p152, %p153
      %p155 = scmp.ne.s32.totalorder %s147, %s149
      %p156 = scmp.eq.s32.totalorder %s34, 1
      %p157 = por %p155, %p156
      %p158 = scmp.ne.s32.totalorder %s149, %s150
      %p159 = scmp.eq.s32.totalorder %s34, 0
      %p160 = por %p158, %p159
      %p161 = scmp.ne.s32.totalorder %s149, %s150
      %p162 = scmp.eq.s32.totalorder %s35, 1
      %p163 = por %p161, %p162
      %p165 = scmp.ne.s32.totalorder %s150, %s164
      %p166 = scmp.eq.s32.totalorder %s35, 0
      %p167 = por %p165, %p166
      %s169 = sadd.s32 %s168, 1
      %p172 = scmp.eq.s32.totalorder %s29, 1
      %p173 = scmp.ne.s32.totalorder %s168, %s170
      %p174 = scmp.eq.s32.totalorder %s29, 0
      %p175 = por %p173, %p174
      %p176 = scmp.ne.s32.totalorder %s168, %s170
      %p177 = scmp.eq.s32.totalorder %s34, 1
      %p178 = por %p176, %p177
      %p179 = scmp.ne.s32.totalorder %s170, %s171
      %p180 = scmp.eq.s32.totalorder %s34, 0
      %p181 = por %p179, %p180
      %p182 = scmp.ne.s32.totalorder %s170, %s171
      %p183 = scmp.eq.s32.totalorder %s35, 1
      %p184 = por %p182, %p183
      %p186 = scmp.ne.s32.totalorder %s171, %s185
      %p187 = scmp.eq.s32.totalorder %s35, 0
      %p188 = por %p186, %p187
      %s190 = sadd.s32 %s189, 1
      %p193 = scmp.eq.s32.totalorder %s29, 1
      %p194 = scmp.ne.s32.totalorder %s189, %s191
      %p195 = scmp.eq.s32.totalorder %s29, 0
      %p196 = por %p194, %p195
      %p197 = scmp.ne.s32.totalorder %s189, %s191
      %p198 = scmp.eq.s32.totalorder %s34, 1
      %p199 = por %p197, %p198
      %p200 = scmp.ne.s32.totalorder %s191, %s192
      %p201 = scmp.eq.s32.totalorder %s34, 0
      %p202 = por %p200, %p201
      %p203 = scmp.ne.s32.totalorder %s191, %s192
      %p204 = scmp.eq.s32.totalorder %s35, 1
      %p205 = por %p203, %p204
      %p207 = scmp.ne.s32.totalorder %s192, %s206
      %p208 = scmp.eq.s32.totalorder %s35, 0
      %p209 = por %p207, %p208
      %s211 = sadd.s32 %s210, 1
      %p214 = scmp.eq.s32.totalorder %s29, 1
      %p215 = scmp.ne.s32.totalorder %s210, %s212
      %p216 = scmp.eq.s32.totalorder %s29, 0
      %p217 = por %p215, %p216
      %p218 = scmp.ne.s32.totalorder %s210, %s212
      %p219 = scmp.eq.s32.totalorder %s34, 1
      %p220 = por %p218, %p219
      %p221 = scmp.ne.s32.totalorder %s212, %s213
      %p222 = scmp.eq.s32.totalorder %s34, 0
      %p223 = por %p221, %p222
      %p224 = scmp.ne.s32.totalorder %s212, %s213
      %p225 = scmp.eq.s32.totalorder %s35, 1
      %p226 = por %p224, %p225
      %p228 = scmp.ne.s32.totalorder %s213, %s227
      %p229 = scmp.eq.s32.totalorder %s35, 0
      %p230 = por %p228, %p229
      %s232 = sadd.s32 %s231, 1
      %p235 = scmp.eq.s32.totalorder %s29, 1
      %p236 = scmp.ne.s32.totalorder %s231, %s233
      %p237 = scmp.eq.s32.totalorder %s29, 0
      %p238 = por %p236, %p237
      %p239 = scmp.ne.s32.totalorder %s231, %s233
      %p240 = scmp.eq.s32.totalorder %s34, 1
      %p241 = por %p239, %p240
      %p242 = scmp.ne.s32.totalorder %s233, %s234
      %p243 = scmp.eq.s32.totalorder %s34, 0
      %p244 = por %p242, %p243
      %p245 = scmp.ne.s32.totalorder %s233, %s234
      %p246 = scmp.eq.s32.totalorder %s35, 1
      %p247 = por %p245, %p246
      %p249 = scmp.ne.s32.totalorder %s234, %s248
      %p250 = scmp.eq.s32.totalorder %s35, 0
      %p251 = por %p249, %p250
      %s253 = sadd.s32 %s252, 1
      %p256 = scmp.eq.s32.totalorder %s29, 1
      %p257 = scmp.ne.s32.totalorder %s252, %s254
      %p258 = scmp.eq.s32.totalorder %s29, 0
      %p259 = por %p257, %p258
      %p260 = scmp.ne.s32.totalorder %s252, %s254
      %p261 = scmp.eq.s32.totalorder %s34, 1
      %p262 = por %p260, %p261
      %p263 = scmp.ne.s32.totalorder %s254, %s255
      %p264 = scmp.eq.s32.totalorder %s34, 0
      %p265 = por %p263, %p264
      %p266 = scmp.ne.s32.totalorder %s254, %s255
      %p267 = scmp.eq.s32.totalorder %s35, 1
      %p268 = por %p266, %p267
      %p270 = scmp.ne.s32.totalorder %s255, %s269
      %p271 = scmp.eq.s32.totalorder %s35, 0
      %p272 = por %p270, %p271
      %s274 = sadd.s32 %s273, 1
      %p277 = scmp.eq.s32.totalorder %s29, 1
      %p278 = scmp.ne.s32.totalorder %s273, %s275
      %p279 = scmp.eq.s32.totalorder %s29, 0
      %p280 = por %p278, %p279
      %p281 = scmp.ne.s32.totalorder %s273, %s275
      %p282 = scmp.eq.s32.totalorder %s34, 1
      %p283 = por %p281, %p282
      %p284 = scmp.ne.s32.totalorder %s275, %s276
      %p285 = scmp.eq.s32.totalorder %s34, 0
      %p286 = por %p284, %p285
      %p287 = scmp.ne.s32.totalorder %s275, %s276
      %p288 = scmp.eq.s32.totalorder %s35, 1
      %p289 = por %p287, %p288
      %p291 = scmp.ne.s32.totalorder %s276, %s290
      %p292 = scmp.eq.s32.totalorder %s35, 0
      %p293 = por %p291, %p292
      %s295 = sadd.s32 %s294, 1
      %p298 = scmp.eq.s32.totalorder %s29, 1
      %p299 = scmp.ne.s32.totalorder %s294, %s296
      %p300 = scmp.eq.s32.totalorder %s29, 0
      %p301 = por %p299, %p300
      %p302 = scmp.ne.s32.totalorder %s294, %s296
      %p303 = scmp.eq.s32.totalorder %s34, 1
      %p304 = por %p302, %p303
      %p305 = scmp.ne.s32.totalorder %s296, %s297
      %p306 = scmp.eq.s32.totalorder %s34, 0
      %p307 = por %p305, %p306
      %p308 = scmp.ne.s32.totalorder %s296, %s297
      %p309 = scmp.eq.s32.totalorder %s35, 1
      %p310 = por %p308, %p309
      %p312 = scmp.ne.s32.totalorder %s297, %s311
      %p313 = scmp.eq.s32.totalorder %s35, 0
      %p314 = por %p312, %p313
      %s315 = ssub.s32 %s36, %s48
      %s316 = ssub.s32 %s37, %s44
      %s317 = sor.u32 %s315, %s316
      %p318 = scmp.eq.s32.totalorder %s317, 0
      %s320 = sadd.s32 %s319, 1
      %s321 = scalar_select %p318, %s319, %s320
      %p324 = pneg %p318
      %p325 = scmp.eq.s32.totalorder %s29, 1
      %p326 = por %p324, %p325
      %p327 = scmp.ne.s32.totalorder %s319, %s322
      %p328 = scmp.eq.s32.totalorder %s29, 0
      %p329 = por %p327, %p328
      %p330 = scmp.ne.s32.totalorder %s319, %s322
      %p331 = scmp.eq.s32.totalorder %s34, 1
      %p332 = por %p330, %p331
      %p333 = scmp.ne.s32.totalorder %s322, %s323
      %p334 = scmp.eq.s32.totalorder %s34, 0
      %p335 = por %p333, %p334
      %p336 = scmp.ne.s32.totalorder %s322, %s323
      %p337 = scmp.eq.s32.totalorder %s35, 1
      %p338 = por %p336, %p337
      %p340 = scmp.ne.s32.totalorder %s323, %s339
      %p341 = scmp.eq.s32.totalorder %s35, 0
      %p342 = por %p340, %p341
      %p343 = scmp.le.s32.totalorder 1, %s29
      %p344 = scmp.lt.s32.totalorder %s29, 3
      %p345 = pnand %p343, %p344
      %p346 = pneg %p345
      // Predicated region
      $region9: #{tpu_custom_call.1} parent=5 // pred_check
        _
      $region10: #{tpu_custom_call.1} parent=5 // pred_check_branch
        %348 = sbr.rel (%p345) target = $region12
      $region11: #{tpu_custom_call.1} parent=5 // pred_region
        %s349 = ssub.s32 %s29, 1
        // Predicated region
        $region13: #{tpu_custom_call.1} parent=11 // pred_check
          %p350 = pneg %p118
        $region14: #{tpu_custom_call.1} parent=11 // pred_check_branch
          %352 = sbr.rel (%p350) target = $region16
        $region15: #{tpu_custom_call.1} parent=11 // pred_region
          _
        $region16: #{tpu_custom_call.1} parent=11 // pred_fallthru
          _
        // Predicated region
        $region17: #{tpu_custom_call.1} parent=11 // pred_check
          %p353 = pneg %p139
        $region18: #{tpu_custom_call.1} parent=11 // pred_check_branch
          %355 = sbr.rel (%p353) target = $region20
        $region19: #{tpu_custom_call.1} parent=11 // pred_region
          _
        $region20: #{tpu_custom_call.1} parent=11 // pred_fallthru
          _
        // Predicated region
        $region21: #{tpu_custom_call.1} parent=11 // pred_check
          %p356 = pneg %p160
        $region22: #{tpu_custom_call.1} parent=11 // pred_check_branch
          %358 = sbr.rel (%p356) target = $region24
        $region23: #{tpu_custom_call.1} parent=11 // pred_region
          _
        $region24: #{tpu_custom_call.1} parent=11 // pred_fallthru
          _
        // Predicated region
        $region25: #{tpu_custom_call.1} parent=11 // pred_check
          %p359 = pneg %p181
        $region26: #{tpu_custom_call.1} parent=11 // pred_check_branch
          %361 = sbr.rel (%p359) target = $region28
        $region27: #{tpu_custom_call.1} parent=11 // pred_region
          _
        $region28: #{tpu_custom_call.1} parent=11 // pred_fallthru
          _
        // Predicated region
        $region29: #{tpu_custom_call.1} parent=11 // pred_check
          %p362 = pneg %p202
        $region30: #{tpu_custom_call.1} parent=11 // pred_check_branch
          %364 = sbr.rel (%p362) target = $region32
        $region31: #{tpu_custom_call.1} parent=11 // pred_region
          _
        $region32: #{tpu_custom_call.1} parent=11 // pred_fallthru
          _
        // Predicated region
        $region33: #{tpu_custom_call.1} parent=11 // pred_check
          %p365 = pneg %p223
        $region34: #{tpu_custom_call.1} parent=11 // pred_check_branch
          %367 = sbr.rel (%p365) target = $region36
        $region35: #{tpu_custom_call.1} parent=11 // pred_region
          _
        $region36: #{tpu_custom_call.1} parent=11 // pred_fallthru
          _
        // Predicated region
        $region37: #{tpu_custom_call.1} parent=11 // pred_check
          %p368 = pneg %p244
        $region38: #{tpu_custom_call.1} parent=11 // pred_check_branch
          %370 = sbr.rel (%p368) target = $region40
        $region39: #{tpu_custom_call.1} parent=11 // pred_region
          _
        $region40: #{tpu_custom_call.1} parent=11 // pred_fallthru
          _
        // Predicated region
        $region41: #{tpu_custom_call.1} parent=11 // pred_check
          %p371 = pneg %p265
        $region42: #{tpu_custom_call.1} parent=11 // pred_check_branch
          %373 = sbr.rel (%p371) target = $region44
        $region43: #{tpu_custom_call.1} parent=11 // pred_region
          _
        $region44: #{tpu_custom_call.1} parent=11 // pred_fallthru
          _
        // Predicated region
        $region45: #{tpu_custom_call.1} parent=11 // pred_check
          %p374 = pneg %p286
        $region46: #{tpu_custom_call.1} parent=11 // pred_check_branch
          %376 = sbr.rel (%p374) target = $region48
        $region47: #{tpu_custom_call.1} parent=11 // pred_region
          _
        $region48: #{tpu_custom_call.1} parent=11 // pred_fallthru
          _
        // Predicated region
        $region49: #{tpu_custom_call.1} parent=11 // pred_check
          %p377 = pneg %p307
        $region50: #{tpu_custom_call.1} parent=11 // pred_check_branch
          %379 = sbr.rel (%p377) target = $region52
        $region51: #{tpu_custom_call.1} parent=11 // pred_region
          _
        $region52: #{tpu_custom_call.1} parent=11 // pred_fallthru
          _
      $region12: #{tpu_custom_call.1} parent=5 // pred_fallthru
        _
      %p380 = scmp.lt.s32.totalorder %s29, 2
      // Predicated region
      $region53: #{tpu_custom_call.1} parent=5 // pred_check
        %p381 = pneg %p380
      $region54: #{tpu_custom_call.1} parent=5 // pred_check_branch
        %383 = sbr.rel (%p381) target = $region56
      $region55: #{tpu_custom_call.1} parent=5 // pred_region
        // Predicated region
        $region57: #{tpu_custom_call.1} parent=55 // pred_check
          %p384 = pneg %p63
        $region58: #{tpu_custom_call.1} parent=55 // pred_check_branch
          %386 = sbr.rel (%p384) target = $region60
        $region59: #{tpu_custom_call.1} parent=55 // pred_region
          %s387 = sand.u32 %s53, 1
          %s388 = scalar_lea.sflag [#allocation4], %s387
          %s389 = sand.u32 %s53, 1
          %s390 = smul.addr %s389, 128
          %s391 = scalar_lea.vmem [#allocation3], %s390
          %s392 = smul.u32 2, %s37
          %394 = vsyncadd %s388, 0
          %s395 = smul.addr %s36, 16
          %s396 = sadd.s32 %s392, %s395
          %s397 = smul.addr %s396, 8
          %s398 = scalar_lea.hbm %s0, %s397
          %s399 = sshll.u32 %s398, 4
          %s400 = int_to_ptr.hbm [resolvable:$true] %s399
          %s401 = sshll.u32 %s391, 4
          %s402 = int_to_ptr.vmem [resolvable:$true] %s401
          %407 = dma.hbm_to_vmem [thread:$0]  %s400, 2048, %s402, %s388, 256, 256, 16
        $region60: #{tpu_custom_call.1} parent=55 // pred_fallthru
          _
        // Predicated region
        $region61: #{tpu_custom_call.1} parent=55 // pred_check
          %p408 = pneg %p91
        $region62: #{tpu_custom_call.1} parent=55 // pred_check_branch
          %410 = sbr.rel (%p408) target = $region64
        $region63: #{tpu_custom_call.1} parent=55 // pred_region
          %s411 = sand.u32 %s81, 1
          %s412 = scalar_lea.sflag [#allocation7], %s411
          %s413 = sand.u32 %s81, 1
          %s414 = smul.addr %s413, 128
          %s415 = scalar_lea.vmem [#allocation6], %s414
          %s416 = smul.u32 2, %s37
          %418 = vsyncadd %s412, 0
          %s419 = smul.addr %s36, 16
          %s420 = sadd.s32 %s416, %s419
          %s421 = smul.addr %s420, 8
          %s422 = scalar_lea.hbm %s1, %s421
          %s423 = sshll.u32 %s422, 4
          %s424 = int_to_ptr.hbm [resolvable:$true] %s423
          %s425 = sshll.u32 %s415, 4
          %s426 = int_to_ptr.vmem [resolvable:$true] %s425
          %431 = dma.hbm_to_vmem [thread:$0]  %s424, 2048, %s426, %s412, 256, 256, 16
        $region64: #{tpu_custom_call.1} parent=55 // pred_fallthru
          _
      $region56: #{tpu_custom_call.1} parent=5 // pred_fallthru
        _
      %p432 = scmp.le.s32.totalorder 1, %s29
      %p433 = scmp.lt.s32.totalorder %s29, 3
      %p434 = pnand %p432, %p433
      %p435 = pneg %p434
      // Predicated region
      $region65: #{tpu_custom_call.1} parent=5 // pred_check
        _
      $region66: #{tpu_custom_call.1} parent=5 // pred_check_branch
        %437 = sbr.rel (%p434) target = $region68
      $region67: #{tpu_custom_call.1} parent=5 // pred_region
        %s438 = ssub.s32 %s29, 1
        %s439 = sand.u32 %s56, 1
        %s440 = scalar_lea.sflag [#allocation4], %s439
        %s441 = sand.u32 %s56, 1
        %s442 = smul.addr %s441, 128
        %s443 = scalar_lea.vmem [#allocation3], %s442
        // Predicated region
        $region69: #{tpu_custom_call.1} parent=67 // pred_check
          %p444 = pneg %p69
        $region70: #{tpu_custom_call.1} parent=67 // pred_check_branch
          %446 = sbr.rel (%p444) target = $region72
        $region71: #{tpu_custom_call.1} parent=67 // pred_region
          %448 = dma.done %s440, 2048
        $region72: #{tpu_custom_call.1} parent=67 // pred_fallthru
          _
        %s449 = sand.u32 %s84, 1
        %s450 = scalar_lea.sflag [#allocation7], %s449
        %s451 = sand.u32 %s84, 1
        %s452 = smul.addr %s451, 128
        %s453 = scalar_lea.vmem [#allocation6], %s452
        // Predicated region
        $region73: #{tpu_custom_call.1} parent=67 // pred_check
          %p454 = pneg %p97
        $region74: #{tpu_custom_call.1} parent=67 // pred_check_branch
          %456 = sbr.rel (%p454) target = $region76
        $region75: #{tpu_custom_call.1} parent=67 // pred_region
          %458 = dma.done %s450, 2048
        $region76: #{tpu_custom_call.1} parent=67 // pred_fallthru
          _
        %s459 = sand.u32 %s56, 1
        %s460 = scalar_lea.sflag [#allocation4], %s459
        %s461 = sand.u32 %s56, 1
        %s462 = smul.addr %s461, 128
        %s463 = scalar_lea.vmem [#allocation3], %s462
        %p464 = pneg %p69
        %p465 = pneg %p66
        %s466 = sand.u32 %s84, 1
        %s467 = scalar_lea.sflag [#allocation7], %s466
        %s468 = sand.u32 %s84, 1
        %s469 = smul.addr %s468, 128
        %s470 = scalar_lea.vmem [#allocation6], %s469
        %p471 = pneg %p97
        %p472 = pneg %p94
        %p473 = pneg %p118
        %p474 = pneg %p115
        %p475 = pneg %p139
        %p476 = pneg %p136
        %p477 = pneg %p160
        %p478 = pneg %p157
        %p479 = pneg %p181
        %p480 = pneg %p178
        %p481 = pneg %p202
        %p482 = pneg %p199
        %p483 = pneg %p223
        %p484 = pneg %p220
        %p485 = pneg %p244
        %p486 = pneg %p241
        %p487 = pneg %p265
        %p488 = pneg %p262
        %p489 = pneg %p286
        %p490 = pneg %p283
        %p491 = pneg %p307
        %p492 = pneg %p304
        %p493 = pneg %p335
        %p494 = pneg %p332
        %s495 = sand.u32 %s322, 1
        %s496 = scalar_lea.sflag [#allocation5], %s495
        %s497 = sand.u32 %s322, 1
        %s498 = smul.addr %s497, 128
        %s499 = scalar_lea.vmem [#allocation8], %s498
        %s500 = smul.u32 2, %s39
        %s501 = smul.u32 2, %s39
        %s502 = smul.u32 2, %s39
        %v503 = vld [vmem:[%s443] sm:$0xff]
        %v504 = vld [vmem:[%s443 + $0x8] sm:$0xff]
        %v505 = vld [vmem:[%s443 + $0x10] sm:$0xff]
        %v506 = vld [vmem:[%s443 + $0x18] sm:$0xff]
        %v507 = vld [vmem:[%s443 + $0x20] sm:$0xff]
        %v508 = vld [vmem:[%s443 + $0x28] sm:$0xff]
        %v509 = vld [vmem:[%s443 + $0x30] sm:$0xff]
        %v510 = vld [vmem:[%s443 + $0x38] sm:$0xff]
        %v511 = vld [vmem:[%s443 + $0x40] sm:$0xff]
        %v512 = vld [vmem:[%s443 + $0x48] sm:$0xff]
        %v513 = vld [vmem:[%s443 + $0x50] sm:$0xff]
        %v514 = vld [vmem:[%s443 + $0x58] sm:$0xff]
        %v515 = vld [vmem:[%s443 + $0x60] sm:$0xff]
        %v516 = vld [vmem:[%s443 + $0x68] sm:$0xff]
        %v517 = vld [vmem:[%s443 + $0x70] sm:$0xff]
        %v518 = vld [vmem:[%s443 + $0x78] sm:$0xff]
        %v519 = vld [vmem:[%s453] sm:$0xff]
        %v520 = vld [vmem:[%s453 + $0x8] sm:$0xff]
        %v521 = vld [vmem:[%s453 + $0x10] sm:$0xff]
        %v522 = vld [vmem:[%s453 + $0x18] sm:$0xff]
        %v523 = vld [vmem:[%s453 + $0x20] sm:$0xff]
        %v524 = vld [vmem:[%s453 + $0x28] sm:$0xff]
        %v525 = vld [vmem:[%s453 + $0x30] sm:$0xff]
        %v526 = vld [vmem:[%s453 + $0x38] sm:$0xff]
        %v527 = vld [vmem:[%s453 + $0x40] sm:$0xff]
        %v528 = vld [vmem:[%s453 + $0x48] sm:$0xff]
        %v529 = vld [vmem:[%s453 + $0x50] sm:$0xff]
        %v530 = vld [vmem:[%s453 + $0x58] sm:$0xff]
        %v531 = vld [vmem:[%s453 + $0x60] sm:$0xff]
        %v532 = vld [vmem:[%s453 + $0x68] sm:$0xff]
        %v533 = vld [vmem:[%s453 + $0x70] sm:$0xff]
        %v534 = vld [vmem:[%s453 + $0x78] sm:$0xff]
        %v535 = vld [vmem:[%s2] sm:$0xf]
        %v536 = vld [vmem:[%s3] sm:$0xf]
        %538 = vset.pattern.permute.xlu0 0
        %539 = vperm.xlu0 %538, %v536
        %v540 = vpop.permute.xlu0 %539
        %vm542 = vcmask 523264
        %v544 = vsel %vm542, %v535, 0
        %546 = vmatpush.msra.mxu0 0.0
        %547 = vmatpush.msra.mxu0 0.0
        %548 = vmatpush.msra.mxu0 0.0
        %549 = vmatpush.msra.mxu0 0.0
        %550 = vmatpush.msra.mxu0 0.0
        %551 = vmatpush.msra.mxu0 0.0
        %552 = vmatpush.msra.mxu0 0.0
        %553 = vmatpush.msra.mxu0 0.0
        %554 = vmatpush.msra.mxu0 %v517
        %555 = vmatpush.msra.mxu0 %v515
        %556 = vmatpush.msra.mxu0 %v513
        %557 = vmatpush.msra.mxu0 %v511
        %558 = vmatpush.msra.mxu0 %v509
        %559 = vmatpush.msra.mxu0 %v507
        %560 = vmatpush.msra.mxu0 %v505
        %561 = vmatpush.msra.mxu0 %v503
        %562 = vmatmul.f32.gmra.mxu0 %v544
        %v563 = vpop.f32.mrf.mxu0
        %v564 = vadd.f32 %v540, %v563
        %565 = vdwg.mxu0
        %566 = vmatpush.msra.mxu0 0.0
        %567 = vmatpush.msra.mxu0 0.0
        %568 = vmatpush.msra.mxu0 0.0
        %569 = vmatpush.msra.mxu0 0.0
        %570 = vmatpush.msra.mxu0 0.0
        %571 = vmatpush.msra.mxu0 0.0
        %572 = vmatpush.msra.mxu0 0.0
        %573 = vmatpush.msra.mxu0 0.0
        %574 = vmatpush.msra.mxu0 %v518
        %575 = vmatpush.msra.mxu0 %v516
        %576 = vmatpush.msra.mxu0 %v514
        %577 = vmatpush.msra.mxu0 %v512
        %578 = vmatpush.msra.mxu0 %v510
        %579 = vmatpush.msra.mxu0 %v508
        %580 = vmatpush.msra.mxu0 %v506
        %581 = vmatpush.msra.mxu0 %v504
        %582 = vmatmul.f32.gmra.mxu0 %v544
        %v583 = vpop.f32.mrf.mxu0
        %v584 = vadd.f32 %v540, %v583
        %585 = vdwg.mxu0
        %v586 = vmul.f32 %v564, 0.01
        %v587 = vmul.f32 %v584, 0.01
        %v588 = vmax.f32 %v564, %v586
        %v589 = vmax.f32 %v584, %v587
        %v590 = vld [vmem:[%s4] sm:$0xf]
        %v591 = vld [vmem:[%s5] sm:$0xf]
        %593 = vset.pattern.permute.xlu0 0
        %594 = vperm.xlu0 %593, %v591
        %v595 = vpop.permute.xlu0 %594
        %v598 = vsel %vm542, %v590, 0
        %600 = vmatpush.msra.mxu0 0.0
        %601 = vmatpush.msra.mxu0 0.0
        %602 = vmatpush.msra.mxu0 0.0
        %603 = vmatpush.msra.mxu0 0.0
        %604 = vmatpush.msra.mxu0 0.0
        %605 = vmatpush.msra.mxu0 0.0
        %606 = vmatpush.msra.mxu0 0.0
        %607 = vmatpush.msra.mxu0 0.0
        %608 = vmatpush.msra.mxu0 %v533
        %609 = vmatpush.msra.mxu0 %v531
        %610 = vmatpush.msra.mxu0 %v529
        %611 = vmatpush.msra.mxu0 %v527
        %612 = vmatpush.msra.mxu0 %v525
        %613 = vmatpush.msra.mxu0 %v523
        %614 = vmatpush.msra.mxu0 %v521
        %615 = vmatpush.msra.mxu0 %v519
        %616 = vmatmul.f32.gmra.mxu0 %v598
        %v617 = vpop.f32.mrf.mxu0
        %v618 = vadd.f32 %v595, %v617
        %619 = vdwg.mxu0
        %620 = vmatpush.msra.mxu0 0.0
        %621 = vmatpush.msra.mxu0 0.0
        %622 = vmatpush.msra.mxu0 0.0
        %623 = vmatpush.msra.mxu0 0.0
        %624 = vmatpush.msra.mxu0 0.0
        %625 = vmatpush.msra.mxu0 0.0
        %626 = vmatpush.msra.mxu0 0.0
        %627 = vmatpush.msra.mxu0 0.0
        %628 = vmatpush.msra.mxu0 %v534
        %629 = vmatpush.msra.mxu0 %v532
        %630 = vmatpush.msra.mxu0 %v530
        %631 = vmatpush.msra.mxu0 %v528
        %632 = vmatpush.msra.mxu0 %v526
        %633 = vmatpush.msra.mxu0 %v524
        %634 = vmatpush.msra.mxu0 %v522
        %635 = vmatpush.msra.mxu0 %v520
        %636 = vmatmul.f32.gmra.mxu0 %v598
        %v637 = vpop.f32.mrf.mxu0
        %v638 = vadd.f32 %v595, %v637
        %639 = vdwg.mxu0
        %v640 = vmul.f32 %v618, 0.01
        %v641 = vmul.f32 %v638, 0.01
        %v642 = vmax.f32 %v618, %v640
        %v643 = vmax.f32 %v638, %v641
        %v644 = vadd.f32 %v588, %v642
        %v645 = vadd.f32 %v589, %v643
        %v646 = vmax.f32 %v644, 0.0
        %v647 = vmax.f32 %v645, 0.0
        %v648 = vld [vmem:[%s6] sm:$0xf]
        %650 = vset.pattern.permute.xlu0 0
        %651 = vperm.xlu0 %650, %v648
        %v652 = vpop.permute.xlu0 %651
        %v654 = vmul.f32 %v646, %v652
        %v655 = vmul.f32 %v647, %v652
        %vm656 = vcmask 1043456
        %v657 = vsel %vm656, %v654, 0.0
        %v658 = vrot.slane %v657, 4
        %v659 = vadd.f32 %v657, %v658
        %v660 = vrot.slane %v659, 2
        %v661 = vadd.f32 %v659, %v660
        %v662 = vrot.slane %v661, 1
        %v663 = vadd.f32 %v661, %v662
        %v664 = vsel %vm656, %v655, 0.0
        %v665 = vrot.slane %v664, 4
        %v666 = vadd.f32 %v664, %v665
        %v667 = vrot.slane %v666, 2
        %v668 = vadd.f32 %v666, %v667
        %v669 = vrot.slane %v668, 1
        %v670 = vadd.f32 %v668, %v669
        %v671 = vld [vmem:[#allocation2] sm:$0x1]
        %673 = vset.pattern.permute.xlu0 0
        %674 = vperm.xlu0 %673, %v671
        %v675 = vpop.permute.xlu0 %674
        %v677 = vperm.slane %v675, 0
        %v678 = vadd.f32 %v663, %v677
        %v679 = vadd.f32 %v670, %v677
        %v680 = vxor.u32 %v678, 2147483648
        %v681 = vxor.u32 %v679, 2147483648
        %v682 = vmul.f32 %v680, 1.442695
        %v683 = vpow.pop %v682
        %v684 = vmul.f32 %v681, 1.442695
        %v685 = vpow.pop %v684
        %v686 = vadd.f32 %v683, 1.0
        %v687 = vadd.f32 %v685, 1.0
        %v688 = vrcp.pop %v686
        %v689 = vmul.f32 %v686, %v688
        %v690 = vsub.f32 1.0, %v689
        %v691 = vmul.f32 %v688, %v690
        %v692 = vadd.f32 %v688, %v691
        %vm693 = vweird.f32 %v686
        %vm694 = vweird.f32 %v688
        %vm695 = vmor %vm693, %vm694
        %v696 = vsel %vm695, %v688, %v692
        %v697 = vand.u32 2147483647, %v686
        %vm698 = vcmp.eq.f32.partialorder %v697, 8.507059e+37
        %v699 = vand.u32 %v686, 2147483648
        %v700 = vor.u32 1.1754944e-38, %v699
        %v701 = vsel %vm698, %v700, %v696
        %v702 = vmul.f32 1.0, %v701
        %v703 = vrcp.pop %v687
        %v704 = vmul.f32 %v687, %v703
        %v705 = vsub.f32 1.0, %v704
        %v706 = vmul.f32 %v703, %v705
        %v707 = vadd.f32 %v703, %v706
        %vm708 = vweird.f32 %v687
        %vm709 = vweird.f32 %v703
        %vm710 = vmor %vm708, %vm709
        %v711 = vsel %vm710, %v703, %v707
        %v712 = vand.u32 2147483647, %v687
        %vm713 = vcmp.eq.f32.partialorder %v712, 8.507059e+37
        %v714 = vand.u32 %v687, 2147483648
        %v715 = vor.u32 1.1754944e-38, %v714
        %v716 = vsel %vm713, %v715, %v711
        %v717 = vmul.f32 1.0, %v716
        %v718 = vld [vmem:[%s8] sm:$0xf]
        %v719 = vsub.f32 %v642, %v588
        %v720 = vsub.f32 %v643, %v589
        %v721 = vmul.f32 %v702, %v719
        %v722 = vmul.f32 %v717, %v720
        %v723 = vadd.f32 %v588, %v721
        %v724 = vadd.f32 %v589, %v722
        %726 = vset.pattern.permute.xlu0 0
        %727 = vperm.xlu0 %726, %v718
        %v728 = vpop.permute.xlu0 %727
        %v730 = vmul.f32 %v728, %v723
        %v731 = vmul.f32 %v728, %v724
        %v732 = vld [vmem:[%s9] sm:$0xf]
        %734 = vset.pattern.permute.xlu0 0
        %735 = vperm.xlu0 %734, %v732
        %v736 = vpop.permute.xlu0 %735
        %v738 = vmul.f32 %v736, %v644
        %v739 = vmul.f32 %v736, %v645
        %v740 = vadd.f32 %v730, %v738
        %v741 = vadd.f32 %v731, %v739
        %v742 = vld [vmem:[%s10] sm:$0xff]
        %v743 = vld [vmem:[%s10 + $0x8] sm:$0xff]
        %v744 = vld [vmem:[%s10 + $0x10] sm:$0xff]
        %v745 = vld [vmem:[%s10 + $0x18] sm:$0xff]
        %v746 = vld [vmem:[%s10 + $0x20] sm:$0xff]
        %v747 = vld [vmem:[%s10 + $0x28] sm:$0xff]
        %v748 = vld [vmem:[%s10 + $0x30] sm:$0xff]
        %v749 = vld [vmem:[%s10 + $0x38] sm:$0xff]
        %v750 = vld [vmem:[%s11] sm:$0xff]
        %v751 = vld [vmem:[%s11 + $0x8] sm:$0xff]
        %v752 = vld [vmem:[%s11 + $0x10] sm:$0xff]
        %v753 = vld [vmem:[%s11 + $0x18] sm:$0xff]
        %v754 = vld [vmem:[%s11 + $0x20] sm:$0xff]
        %v755 = vld [vmem:[%s11 + $0x28] sm:$0xff]
        %v756 = vld [vmem:[%s11 + $0x30] sm:$0xff]
        %v757 = vld [vmem:[%s11 + $0x38] sm:$0xff]
        %759 = vset.pattern.permute.xlu0 0
        %760 = vperm.xlu0 %759, %v750
        %v761 = vpop.permute.xlu0 %760
        %764 = vset.pattern.permute.xlu0 0
        %765 = vperm.xlu0 %764, %v751
        %v766 = vpop.permute.xlu0 %765
        %769 = vset.pattern.permute.xlu0 0
        %770 = vperm.xlu0 %769, %v752
        %v771 = vpop.permute.xlu0 %770
        %774 = vset.pattern.permute.xlu0 0
        %775 = vperm.xlu0 %774, %v753
        %v776 = vpop.permute.xlu0 %775
        %779 = vset.pattern.permute.xlu0 0
        %780 = vperm.xlu0 %779, %v754
        %v781 = vpop.permute.xlu0 %780
        %784 = vset.pattern.permute.xlu0 0
        %785 = vperm.xlu0 %784, %v755
        %v786 = vpop.permute.xlu0 %785
        %789 = vset.pattern.permute.xlu0 0
        %790 = vperm.xlu0 %789, %v756
        %v791 = vpop.permute.xlu0 %790
        %794 = vset.pattern.permute.xlu0 0
        %795 = vperm.xlu0 %794, %v757
        %v796 = vpop.permute.xlu0 %795
        %vm798 = vcmask 31744
        %v800 = vsel %vm798, %v742, 0
        %v803 = vsel %vm798, %v743, 0
        %v806 = vsel %vm798, %v744, 0
        %v809 = vsel %vm798, %v745, 0
        %v812 = vsel %vm798, %v746, 0
        %v815 = vsel %vm798, %v747, 0
        %v818 = vsel %vm798, %v748, 0
        %v821 = vsel %vm798, %v749, 0
        %v824 = vsel %vm656, %v740, 0
        %v827 = vsel %vm656, %v741, 0
        %829 = vmatpush.msra.mxu0 0.0
        %830 = vmatpush.msra.mxu0 0.0
        %831 = vmatpush.msra.mxu0 0.0
        %832 = vmatpush.msra.mxu0 0.0
        %833 = vmatpush.msra.mxu0 0.0
        %834 = vmatpush.msra.mxu0 0.0
        %835 = vmatpush.msra.mxu0 0.0
        %836 = vmatpush.msra.mxu0 0.0
        %837 = vmatpush.msra.mxu0 0.0
        %838 = vmatpush.msra.mxu0 0.0
        %839 = vmatpush.msra.mxu0 0.0
        %840 = vmatpush.msra.mxu0 0.0
        %841 = vmatpush.msra.mxu0 0.0
        %842 = vmatpush.msra.mxu0 0.0
        %843 = vmatpush.msra.mxu0 0.0
        %844 = vmatpush.msra.mxu0 %v824
        %845 = vmatmul.f32.gmra.mxu0 %v800
        %v846 = vpop.f32.mrf.mxu0
        %v847 = vadd.f32 %v761, %v846
        %848 = vmatmul.f32.gmra.mxu0 %v803
        %v849 = vpop.f32.mrf.mxu0
        %v850 = vadd.f32 %v766, %v849
        %851 = vmatmul.f32.gmra.mxu0 %v806
        %v852 = vpop.f32.mrf.mxu0
        %v853 = vadd.f32 %v771, %v852
        %854 = vmatmul.f32.gmra.mxu0 %v809
        %v855 = vpop.f32.mrf.mxu0
        %v856 = vadd.f32 %v776, %v855
        %857 = vmatmul.f32.gmra.mxu0 %v812
        %v858 = vpop.f32.mrf.mxu0
        %v859 = vadd.f32 %v781, %v858
        %860 = vmatmul.f32.gmra.mxu0 %v815
        %v861 = vpop.f32.mrf.mxu0
        %v862 = vadd.f32 %v786, %v861
        %863 = vmatmul.f32.gmra.mxu0 %v818
        %v864 = vpop.f32.mrf.mxu0
        %v865 = vadd.f32 %v791, %v864
        %866 = vmatmul.f32.gmra.mxu0 %v821
        %v867 = vpop.f32.mrf.mxu0
        %v868 = vadd.f32 %v796, %v867
        %869 = vdwg.mxu0
        %870 = vmatpush.msra.mxu0 0.0
        %871 = vmatpush.msra.mxu0 0.0
        %872 = vmatpush.msra.mxu0 0.0
        %873 = vmatpush.msra.mxu0 0.0
        %874 = vmatpush.msra.mxu0 0.0
        %875 = vmatpush.msra.mxu0 0.0
        %876 = vmatpush.msra.mxu0 0.0
        %877 = vmatpush.msra.mxu0 0.0
        %878 = vmatpush.msra.mxu0 0.0
        %879 = vmatpush.msra.mxu0 0.0
        %880 = vmatpush.msra.mxu0 0.0
        %881 = vmatpush.msra.mxu0 0.0
        %882 = vmatpush.msra.mxu0 0.0
        %883 = vmatpush.msra.mxu0 0.0
        %884 = vmatpush.msra.mxu0 0.0
        %885 = vmatpush.msra.mxu0 %v827
        %886 = vmatmul.f32.gmra.mxu0 %v800
        %v887 = vpop.f32.mrf.mxu0
        %v888 = vadd.f32 %v761, %v887
        %889 = vmatmul.f32.gmra.mxu0 %v803
        %v890 = vpop.f32.mrf.mxu0
        %v891 = vadd.f32 %v766, %v890
        %892 = vmatmul.f32.gmra.mxu0 %v806
        %v893 = vpop.f32.mrf.mxu0
        %v894 = vadd.f32 %v771, %v893
        %895 = vmatmul.f32.gmra.mxu0 %v809
        %v896 = vpop.f32.mrf.mxu0
        %v897 = vadd.f32 %v776, %v896
        %898 = vmatmul.f32.gmra.mxu0 %v812
        %v899 = vpop.f32.mrf.mxu0
        %v900 = vadd.f32 %v781, %v899
        %901 = vmatmul.f32.gmra.mxu0 %v815
        %v902 = vpop.f32.mrf.mxu0
        %v903 = vadd.f32 %v786, %v902
        %904 = vmatmul.f32.gmra.mxu0 %v818
        %v905 = vpop.f32.mrf.mxu0
        %v906 = vadd.f32 %v791, %v905
        %907 = vmatmul.f32.gmra.mxu0 %v821
        %v908 = vpop.f32.mrf.mxu0
        %v909 = vadd.f32 %v796, %v908
        %910 = vdwg.mxu0
        %911 = vst [vmem:[%s499] sm:$0xff] %v847
        %912 = vst [vmem:[%s499 + $0x8] sm:$0xff] %v888
        %913 = vst [vmem:[%s499 + $0x10] sm:$0xff] %v850
        %914 = vst [vmem:[%s499 + $0x18] sm:$0xff] %v891
        %915 = vst [vmem:[%s499 + $0x20] sm:$0xff] %v853
        %916 = vst [vmem:[%s499 + $0x28] sm:$0xff] %v894
        %917 = vst [vmem:[%s499 + $0x30] sm:$0xff] %v856
        %918 = vst [vmem:[%s499 + $0x38] sm:$0xff] %v897
        %919 = vst [vmem:[%s499 + $0x40] sm:$0xff] %v859
        %920 = vst [vmem:[%s499 + $0x48] sm:$0xff] %v900
        %921 = vst [vmem:[%s499 + $0x50] sm:$0xff] %v862
        %922 = vst [vmem:[%s499 + $0x58] sm:$0xff] %v903
        %923 = vst [vmem:[%s499 + $0x60] sm:$0xff] %v865
        %924 = vst [vmem:[%s499 + $0x68] sm:$0xff] %v906
        %925 = vst [vmem:[%s499 + $0x70] sm:$0xff] %v868
        %926 = vst [vmem:[%s499 + $0x78] sm:$0xff] %v909
        %s927 = sand.u32 %s322, 1
        %s928 = scalar_lea.sflag [#allocation5], %s927
        %s929 = sand.u32 %s322, 1
        %s930 = smul.addr %s929, 128
        %s931 = scalar_lea.vmem [#allocation8], %s930
        // Predicated region
        $region77: #{tpu_custom_call.1} parent=67 // pred_check
          %p932 = pneg %p332
        $region78: #{tpu_custom_call.1} parent=67 // pred_check_branch
          %934 = sbr.rel (%p932) target = $region80
        $region79: #{tpu_custom_call.1} parent=67 // pred_region
          %s935 = smul.u32 2, %s39
          %937 = vsyncadd %s928, 0
          %s938 = smul.addr %s38, 16
          %s939 = sadd.s32 %s935, %s938
          %s940 = smul.addr %s939, 8
          %s941 = scalar_lea.hbm %s12, %s940
          %s942 = sshll.u32 %s931, 4
          %s943 = int_to_ptr.vmem [resolvable:$true] %s942
          %s944 = sshll.u32 %s941, 4
          %s945 = int_to_ptr.hbm [resolvable:$true] %s944
          %950 = dma.vmem_to_hbm [thread:$0]  %s943, 2048, %s945, %s928, 256, 256, 16
        $region80: #{tpu_custom_call.1} parent=67 // pred_fallthru
          _
      $region68: #{tpu_custom_call.1} parent=5 // pred_fallthru
        _
      %p951 = scmp.le.s32.totalorder 2, %s29
      // Predicated region
      $region81: #{tpu_custom_call.1} parent=5 // pred_check
        %p952 = pneg %p951
      $region82: #{tpu_custom_call.1} parent=5 // pred_check_branch
        %954 = sbr.rel (%p952) target = $region84
      $region83: #{tpu_custom_call.1} parent=5 // pred_region
        %s955 = ssub.s32 %s29, 2
        // Predicated region
        $region85: #{tpu_custom_call.1} parent=83 // pred_check
          %p956 = pneg %p338
        $region86: #{tpu_custom_call.1} parent=83 // pred_check_branch
          %958 = sbr.rel (%p956) target = $region88
        $region87: #{tpu_custom_call.1} parent=83 // pred_region
          %s959 = sand.u32 %s323, 1
          %s960 = scalar_lea.sflag [#allocation5], %s959
          %s961 = sand.u32 %s323, 1
          %s962 = smul.addr %s961, 128
          %s963 = scalar_lea.vmem [#allocation8], %s962
          %965 = dma.done %s960, 2048
        $region88: #{tpu_custom_call.1} parent=83 // pred_fallthru
          _
      $region84: #{tpu_custom_call.1} parent=5 // pred_fallthru
        _
    $region6: #{tpu_custom_call.1} parent=1 // loop_footer
      %s33 = sadd.s32 1, %s29
    $region7: #{tpu_custom_call.1} parent=1 // loop_footer_branch
      %28 = sbr.rel target = $region3
    $region8: #{tpu_custom_call.1} parent=1 // loop_exit
      _
    %966 = vsyncpa [#allocation4], 1
    %s967 = scalar_lea.sflag [#allocation4], 1
    %968 = vsyncpa %s967, 1
    %969 = vsyncpa [#allocation7], 1
    %s970 = scalar_lea.sflag [#allocation7], 1
    %971 = vsyncpa %s970, 1
    %972 = vsyncpa [#allocation5], 1
    %s973 = scalar_lea.sflag [#allocation5], 1
    %974 = vsyncpa %s973, 1

</llo_original>
